<compile_context>
chip_gen: v7x
topology: tpu7x:2x2x1
jax: 0.10.0
libtpu: 0.0.40
codegen_flags: <defaults>
</compile_context>

<pallas_src>
import functools

import jax
import jax.numpy as jnp
from jax import lax
from jax.experimental import pallas as pl
from jax.experimental.pallas import tpu as pltpu

EPS = 1e-5
_VMEM_LIMIT = 32 * 1024 * 1024  # safe scoped budget on v5e/v6e/v7x


def _round_up(n, m):
    return ((n + m - 1) // m) * m


@functools.partial(jax.jit, static_argnames=("tile_rows",))
def cox_forward(x, gamma, beta, weight, bias, *, tile_rows=4096):
    """x: (B, F); gamma, beta: (F,); weight: (1, F); bias: (1,). Returns (B, 1) f32."""
    B, F = x.shape
    f32 = jnp.float32

    # ---- lane packing: fold `pack` consecutive rows into one 128-lane row ------
    if F <= 128 and 128 % F == 0 and B % (128 // F) == 0:
        pack = 128 // F
    else:
        pack = 1                                    # general-F fallback
    C = F * pack
    R = B // pack
    xp = x.reshape(R, C)                            # row-major reshape: no HBM copy

    g = gamma.reshape(1, F).astype(f32)
    bt = beta.reshape(1, F).astype(f32)
    w = weight.reshape(1, F).astype(f32)
    b0 = bias.reshape(()).astype(f32)

    gw = jnp.tile(g * w, (1, pack))                 # (1, C)  gamma*w, lane-tiled
    c0 = (b0 + jnp.sum(bt * w)).reshape(1, 1)       # batch-independent part of c
    lane = jnp.arange(C, dtype=jnp.int32)
    seg = jnp.arange(pack, dtype=jnp.int32)
    # 0/1 block-diagonal (C, pack): column j selects lanes [j*F, (j+1)*F).
    ones_bd = (lane[:, None] // F == seg[None, :]).astype(f32)

    # ---- tile selection ---------------------------------------------------------
    max_tile = max(32, int(tile_rows))
    if R <= max_tile:
        tile = R                                    # single resident tile, no mask
        needs_mask = False
    else:
        tile = _round_up(max_tile, 32)              # sublane multiple for any dtype
        needs_mask = (R % tile) != 0
    num_tiles = -(-R // tile)

    inv_B = 1.0 / B
    inv_pack = 1.0 / pack

    def kernel(x_ref, gw_ref, onesbd_ref, c0_ref, o_ref,
               ssum_ref, ssq_ref, shift_ref, weff_ref, c_ref):
        phase = pl.program_id(0)
        t = pl.program_id(1)

        def fold(v):
            # Sum the `pack` interleaved F-lane segments; every lane ends up holding
            # the full per-feature total (replicated across segments).
            total = v
            for j in range(1, pack):
                total = total + pltpu.roll(v, shift=j * F, axis=1)
            return total

        # -------- phase 0: shifted sum / sum-of-squares over the full batch ------
        @pl.when(phase == 0)
        def _stats_phase():
            xv = x_ref[...].astype(f32)             # cast in-kernel (bf16 ok)

            @pl.when(t == 0)
            def _init():
                row0 = xv[0:1, :]                   # first `pack` original rows
                shift_ref[...] = fold(row0) * inv_pack
                ssum_ref[...] = jnp.zeros_like(ssum_ref)
                ssq_ref[...] = jnp.zeros_like(ssq_ref)

            xc = xv - shift_ref[...]
            if needs_mask:                          # ragged trailing tile only
                rows = t * tile + lax.broadcasted_iota(jnp.int32, (tile, C), 0)
                xc = jnp.where(rows < R, xc, 0.0)
            ssum_ref[...] += jnp.sum(xc, axis=0, keepdims=True)
            ssq_ref[...] += jnp.sum(xc * xc, axis=0, keepdims=True)

            @pl.when(t == num_tiles - 1)
            def _finalize():                        # fused finalize (no XLA ops)
                mean_sh = fold(ssum_ref[...]) * inv_B
                var = jnp.maximum(fold(ssq_ref[...]) * inv_B - mean_sh * mean_sh, 0.0)
                inv_std = lax.rsqrt(var + EPS)
                w_e = gw_ref[...] * inv_std          # (1, C) effective weights
                weff_ref[...] = w_e
                mean = mean_sh + shift_ref[...]
                c_ref[...] = (c0_ref[...]
                              - jnp.sum(mean * w_e, keepdims=True) * inv_pack)

        # -------- phase 1: projection  out = (x*w_eff) @ ones_bd + c -------------
        @pl.when(phase == 1)
        def _project_phase():
            xv = x_ref[...].astype(f32)
            p = xv * weff_ref[...]
            o_ref[...] = jnp.dot(p, onesbd_ref[...],
                                 preferred_element_type=f32) + c_ref[...]

    out = pl.pallas_call(
        kernel,
        out_shape=jax.ShapeDtypeStruct((R, pack), f32),
        grid=(2, num_tiles),
        in_specs=[
            pl.BlockSpec((tile, C), lambda p, t: (t, 0)),      # x (storage dtype)
            pl.BlockSpec((1, C), lambda p, t: (0, 0)),         # gamma*w tiled
            pl.BlockSpec((C, pack), lambda p, t: (0, 0)),      # block-diag ones
            pl.BlockSpec((1, 1), lambda p, t: (0, 0)),         # c0 scalar
        ],
        # phase 0 parks on block 0 (never written back there); phase 1 writes each
        # output block exactly once.
        out_specs=pl.BlockSpec((tile, pack), lambda p, t: (p * t, 0)),
        scratch_shapes=[
            pltpu.VMEM((1, C), f32),   # ssum
            pltpu.VMEM((1, C), f32),   # ssq
            pltpu.VMEM((1, C), f32),   # shift
            pltpu.VMEM((1, C), f32),   # w_eff
            pltpu.VMEM((1, 1), f32),   # c
        ],
        compiler_params=pltpu.CompilerParams(
            dimension_semantics=("arbitrary", "arbitrary"),
            vmem_limit_bytes=_VMEM_LIMIT,
        ),
    )(xp, gw, ones_bd, c0)

    return out.reshape(B, 1)


def _reference(x, gamma, beta, weight, bias):
    """Pure-JAX reference: training-mode BatchNorm1d followed by Linear(F, 1)."""
    x = x.astype(jnp.float32)
    mean = jnp.mean(x, axis=0, keepdims=True)
    var = jnp.mean((x - mean) ** 2, axis=0, keepdims=True)
    xhat = (x - mean) / jnp.sqrt(var + EPS)
    y = xhat * gamma[None, :].astype(jnp.float32) + beta[None, :].astype(jnp.float32)
    return y @ weight.astype(jnp.float32).T + bias.astype(jnp.float32)[None, :]


def _check(out, ref, tol):
    assert out.shape == ref.shape, (out.shape, ref.shape)
    err = float(jnp.max(jnp.abs(out - ref)))
    assert jnp.allclose(out, ref, atol=tol, rtol=tol), err


if __name__ == "__main__":
    key = jax.random.PRNGKey(0)
    kx, kg, kb, kw, kbias, kx2, kg5, kb5, kw5, kx5 = jax.random.split(key, 10)

    n_input = 32
    gamma = 1.0 + 0.1 * jax.random.normal(kg, (n_input,), dtype=jnp.float32)
    beta = 0.1 * jax.random.normal(kb, (n_input,), dtype=jnp.float32)
    weight = jax.random.normal(kw, (1, n_input), dtype=jnp.float32) / jnp.sqrt(n_input)
    bias = 0.05 * jax.random.normal(kbias, (1,), dtype=jnp.float32)

    # 1) Small case matching the toy module: B=8, F=32 -> packed (2, 128), 1 tile.
    B = 8
    x = jax.random.normal(kx, (B, n_input), dtype=jnp.float32)
    out = cox_forward(x, gamma, beta, weight, bias)
    jax.block_until_ready(out)
    _check(out, _reference(x, gamma, beta, weight, bias), 3e-4)

    # 2) Bigger batch with a nonzero mean (exercises the shifted-stats path);
    #    still a single resident tile -> x read from HBM exactly once.
    B2 = 2500
    x2 = jax.random.normal(kx2, (B2, n_input), dtype=jnp.float32) * 2.0 + 3.0
    out2 = cox_forward(x2, gamma, beta, weight, bias)
    jax.block_until_ready(out2)
    _check(out2, _reference(x2, gamma, beta, weight, bias), 3e-4)

    # 3) Force the streaming multi-tile path + ragged-tail masking (R=625, tile=64).
    out3 = cox_forward(x2, gamma, beta, weight, bias, tile_rows=64)
    jax.block_until_ready(out3)
    _check(out3, _reference(x2, gamma, beta, weight, bias), 3e-4)

    # 4) bf16 storage dtype: kept bf16 through the BlockSpec, cast to f32 in-kernel.
    x4 = x2.astype(jnp.bfloat16)
    out4 = cox_forward(x4, gamma, beta, weight, bias)
    jax.block_until_ready(out4)
    _check(out4, _reference(x4, gamma, beta, weight, bias), 5e-4)

    # 5) Feature count that does not pack into 128 lanes (pack = 1 fallback).
    n5, B5 = 48, 40
    gamma5 = 1.0 + 0.1 * jax.random.normal(kg5, (n5,), dtype=jnp.float32)
    beta5 = 0.1 * jax.random.normal(kb5, (n5,), dtype=jnp.float32)
    weight5 = jax.random.normal(kw5, (1, n5), dtype=jnp.float32) / jnp.sqrt(n5)
    x5 = jax.random.normal(kx5, (B5, n5), dtype=jnp.float32)
    out5 = cox_forward(x5, gamma5, beta5, weight5, bias)
    jax.block_until_ready(out5)
    _check(out5, _reference(x5, gamma5, beta5, weight5, bias), 3e-4)

    print("KERNEL_OK")
</pallas_src>

<mosaic_0001>
module attributes {stable_mosaic.version = 11 : i64} {
  func.func @kernel(%arg0: i32, %arg1: i32, %arg2: memref<2x128xf32, #tpu.memory_space<vmem>>, %arg3: memref<1x128xf32, #tpu.memory_space<vmem>>, %arg4: memref<128x4xf32, #tpu.memory_space<vmem>>, %arg5: memref<1x1xf32, #tpu.memory_space<vmem>>, %arg6: memref<2x4xf32, #tpu.memory_space<vmem>>, %arg7: memref<1x128xf32, #tpu.memory_space<vmem>>, %arg8: memref<1x128xf32, #tpu.memory_space<vmem>>, %arg9: memref<1x128xf32, #tpu.memory_space<vmem>>, %arg10: memref<1x128xf32, #tpu.memory_space<vmem>>, %arg11: memref<1x1xf32, #tpu.memory_space<vmem>>) attributes {dimension_semantics = [#tpu.dimension_semantics<arbitrary>, #tpu.dimension_semantics<arbitrary>], iteration_bounds = array<i64: 2, 1>, scalar_prefetch = 0 : i64, scratch_operands = 5 : i64, tpu.core_type = #tpu.core_type<tc>, window_params = [{transform_indices = @transform_0, window_bounds = array<i64: 2, 128>}, {pipeline_mode = #tpu.pipeline_mode<synchronous>, transform_indices = @transform_1, window_bounds = array<i64: 1, 128>}, {pipeline_mode = #tpu.pipeline_mode<synchronous>, transform_indices = @transform_2, window_bounds = array<i64: 128, 4>}, {pipeline_mode = #tpu.pipeline_mode<synchronous>, transform_indices = @transform_3, window_bounds = array<i64: 1, 1>}, {transform_indices = @transform_4, window_bounds = array<i64: 2, 4>}]} {
    %c0_i32 = arith.constant 0 : i32
    %0 = arith.cmpi eq, %arg0, %c0_i32 : i32
    %1 = arith.extui %0 : i1 to i32
    %c0_i32_0 = arith.constant 0 : i32
    %2 = arith.cmpi ne, %1, %c0_i32_0 : i32
    scf.if %2 {
      %c0 = arith.constant 0 : index
      %c0_2 = arith.constant 0 : index
      %6 = vector.load %arg2[%c0, %c0_2] : memref<2x128xf32, #tpu.memory_space<vmem>>, vector<2x128xf32>
      %c0_i32_3 = arith.constant 0 : i32
      %7 = arith.cmpi eq, %arg1, %c0_i32_3 : i32
      %8 = arith.extui %7 : i1 to i32
      %c0_i32_4 = arith.constant 0 : i32
      %9 = arith.cmpi ne, %8, %c0_i32_4 : i32
      scf.if %9 {
        %27 = vector.extract_strided_slice %6 {offsets = [0, 0], sizes = [1, 128], strides = [1, 1]} : vector<2x128xf32> to vector<1x128xf32>
        %c32_i32 = arith.constant 32 : i32
        %28 = tpu.dynamic_rotate %27 by %c32_i32 dim 1 : vector<1x128xf32>, i32 -> vector<1x128xf32>
        %29 = arith.addf %27, %28 : vector<1x128xf32>
        %c64_i32 = arith.constant 64 : i32
        %30 = tpu.dynamic_rotate %27 by %c64_i32 dim 1 : vector<1x128xf32>, i32 -> vector<1x128xf32>
        %31 = arith.addf %29, %30 : vector<1x128xf32>
        %c96_i32 = arith.constant 96 : i32
        %32 = tpu.dynamic_rotate %27 by %c96_i32 dim 1 : vector<1x128xf32>, i32 -> vector<1x128xf32>
        %33 = arith.addf %31, %32 : vector<1x128xf32>
        %cst_18 = arith.constant 2.500000e-01 : f32
        %34 = vector.broadcast %cst_18 : f32 to vector<1x128xf32>
        %35 = arith.mulf %33, %34 : vector<1x128xf32>
        %c0_19 = arith.constant 0 : index
        %c0_20 = arith.constant 0 : index
        %36 = vector.load %arg9[%c0_19, %c0_20] : memref<1x128xf32, #tpu.memory_space<vmem>>, vector<1x128xf32>
        tpu.vector_store %arg9[%c0_19, %c0_20], %35 {strides = array<i32>} : memref<1x128xf32, #tpu.memory_space<vmem>>, vector<1x128xf32>,
        %cst_21 = arith.constant 0.000000e+00 : f32
        %37 = vector.broadcast %cst_21 : f32 to vector<1x128xf32>
        %c0_22 = arith.constant 0 : index
        %c0_23 = arith.constant 0 : index
        %38 = vector.load %arg7[%c0_22, %c0_23] : memref<1x128xf32, #tpu.memory_space<vmem>>, vector<1x128xf32>
        tpu.vector_store %arg7[%c0_22, %c0_23], %37 {strides = array<i32>} : memref<1x128xf32, #tpu.memory_space<vmem>>, vector<1x128xf32>,
        %cst_24 = arith.constant 0.000000e+00 : f32
        %39 = vector.broadcast %cst_24 : f32 to vector<1x128xf32>
        %c0_25 = arith.constant 0 : index
        %c0_26 = arith.constant 0 : index
        %40 = vector.load %arg8[%c0_25, %c0_26] : memref<1x128xf32, #tpu.memory_space<vmem>>, vector<1x128xf32>
        tpu.vector_store %arg8[%c0_25, %c0_26], %39 {strides = array<i32>} : memref<1x128xf32, #tpu.memory_space<vmem>>, vector<1x128xf32>,
      } else {
      }
      %c0_5 = arith.constant 0 : index
      %c0_6 = arith.constant 0 : index
      %10 = vector.load %arg9[%c0_5, %c0_6] : memref<1x128xf32, #tpu.memory_space<vmem>>, vector<1x128xf32>
      %11 = vector.broadcast %10 : vector<1x128xf32> to vector<2x128xf32>
      %12 = arith.subf %6, %11 : vector<2x128xf32>
      %c0_7 = arith.constant 0 : index
      %c0_8 = arith.constant 0 : index
      %13 = vector.load %arg7[%c0_7, %c0_8] : memref<1x128xf32, #tpu.memory_space<vmem>>, vector<1x128xf32>
      %cst = arith.constant dense<0.000000e+00> : vector<128xf32>
      %14 = vector.multi_reduction <add>, %12, %cst [0] : vector<2x128xf32> to vector<128xf32>
      %15 = vector.shape_cast %14 : vector<128xf32> to vector<1x128xf32>
      %16 = arith.addf %13, %15 : vector<1x128xf32>
      %c0_9 = arith.constant 0 : index
      %c0_10 = arith.constant 0 : index
      %17 = vector.load %arg7[%c0_9, %c0_10] : memref<1x128xf32, #tpu.memory_space<vmem>>, vector<1x128xf32>
      tpu.vector_store %arg7[%c0_9, %c0_10], %16 {strides = array<i32>} : memref<1x128xf32, #tpu.memory_space<vmem>>, vector<1x128xf32>,
      %c0_11 = arith.constant 0 : index
      %c0_12 = arith.constant 0 : index
      %18 = vector.load %arg8[%c0_11, %c0_12] : memref<1x128xf32, #tpu.memory_space<vmem>>, vector<1x128xf32>
      %19 = arith.mulf %12, %12 : vector<2x128xf32>
      %cst_13 = arith.constant dense<0.000000e+00> : vector<128xf32>
      %20 = vector.multi_reduction <add>, %19, %cst_13 [0] : vector<2x128xf32> to vector<128xf32>
      %21 = vector.shape_cast %20 : vector<128xf32> to vector<1x128xf32>
      %22 = arith.addf %18, %21 : vector<1x128xf32>
      %c0_14 = arith.constant 0 : index
      %c0_15 = arith.constant 0 : index
      %23 = vector.load %arg8[%c0_14, %c0_15] : memref<1x128xf32, #tpu.memory_space<vmem>>, vector<1x128xf32>
      tpu.vector_store %arg8[%c0_14, %c0_15], %22 {strides = array<i32>} : memref<1x128xf32, #tpu.memory_space<vmem>>, vector<1x128xf32>,
      %c0_i32_16 = arith.constant 0 : i32
      %24 = arith.cmpi eq, %arg1, %c0_i32_16 : i32
      %25 = arith.extui %24 : i1 to i32
      %c0_i32_17 = arith.constant 0 : i32
      %26 = arith.cmpi ne, %25, %c0_i32_17 : i32
      scf.if %26 {
        %c0_18 = arith.constant 0 : index
        %c0_19 = arith.constant 0 : index
        %27 = vector.load %arg7[%c0_18, %c0_19] : memref<1x128xf32, #tpu.memory_space<vmem>>, vector<1x128xf32>
        %c32_i32 = arith.constant 32 : i32
        %28 = tpu.dynamic_rotate %27 by %c32_i32 dim 1 : vector<1x128xf32>, i32 -> vector<1x128xf32>
        %29 = arith.addf %27, %28 : vector<1x128xf32>
        %c64_i32 = arith.constant 64 : i32
        %30 = tpu.dynamic_rotate %27 by %c64_i32 dim 1 : vector<1x128xf32>, i32 -> vector<1x128xf32>
        %31 = arith.addf %29, %30 : vector<1x128xf32>
        %c96_i32 = arith.constant 96 : i32
        %32 = tpu.dynamic_rotate %27 by %c96_i32 dim 1 : vector<1x128xf32>, i32 -> vector<1x128xf32>
        %33 = arith.addf %31, %32 : vector<1x128xf32>
        %cst_20 = arith.constant 1.250000e-01 : f32
        %34 = vector.broadcast %cst_20 : f32 to vector<1x128xf32>
        %35 = arith.mulf %33, %34 : vector<1x128xf32>
        %c0_21 = arith.constant 0 : index
        %c0_22 = arith.constant 0 : index
        %36 = vector.load %arg8[%c0_21, %c0_22] : memref<1x128xf32, #tpu.memory_space<vmem>>, vector<1x128xf32>
        %c32_i32_23 = arith.constant 32 : i32
        %37 = tpu.dynamic_rotate %36 by %c32_i32_23 dim 1 : vector<1x128xf32>, i32 -> vector<1x128xf32>
        %38 = arith.addf %36, %37 : vector<1x128xf32>
        %c64_i32_24 = arith.constant 64 : i32
        %39 = tpu.dynamic_rotate %36 by %c64_i32_24 dim 1 : vector<1x128xf32>, i32 -> vector<1x128xf32>
        %40 = arith.addf %38, %39 : vector<1x128xf32>
        %c96_i32_25 = arith.constant 96 : i32
        %41 = tpu.dynamic_rotate %36 by %c96_i32_25 dim 1 : vector<1x128xf32>, i32 -> vector<1x128xf32>
        %42 = arith.addf %40, %41 : vector<1x128xf32>
        %cst_26 = arith.constant 1.250000e-01 : f32
        %43 = vector.broadcast %cst_26 : f32 to vector<1x128xf32>
        %44 = arith.mulf %42, %43 : vector<1x128xf32>
        %45 = arith.mulf %35, %35 : vector<1x128xf32>
        %46 = arith.subf %44, %45 : vector<1x128xf32>
        %cst_27 = arith.constant 0.000000e+00 : f32
        %47 = vector.broadcast %cst_27 : f32 to vector<1x128xf32>
        %48 = arith.maximumf %46, %47 : vector<1x128xf32>
        %cst_28 = arith.constant 9.99999974E-6 : f32
        %49 = vector.broadcast %cst_28 : f32 to vector<1x128xf32>
        %50 = arith.addf %48, %49 : vector<1x128xf32>
        %51 = math.rsqrt %50 : vector<1x128xf32>
        %c0_29 = arith.constant 0 : index
        %c0_30 = arith.constant 0 : index
        %52 = vector.load %arg3[%c0_29, %c0_30] : memref<1x128xf32, #tpu.memory_space<vmem>>, vector<1x128xf32>
        %53 = arith.mulf %52, %51 : vector<1x128xf32>
        %c0_31 = arith.constant 0 : index
        %c0_32 = arith.constant 0 : index
        %54 = vector.load %arg10[%c0_31, %c0_32] : memref<1x128xf32, #tpu.memory_space<vmem>>, vector<1x128xf32>
        tpu.vector_store %arg10[%c0_31, %c0_32], %53 {strides = array<i32>} : memref<1x128xf32, #tpu.memory_space<vmem>>, vector<1x128xf32>,
        %c0_33 = arith.constant 0 : index
        %c0_34 = arith.constant 0 : index
        %55 = vector.load %arg9[%c0_33, %c0_34] : memref<1x128xf32, #tpu.memory_space<vmem>>, vector<1x128xf32>
        %56 = arith.addf %35, %55 : vector<1x128xf32>
        %c0_35 = arith.constant 0 : index
        %c0_36 = arith.constant 0 : index
        %57 = vector.load %arg5[%c0_35, %c0_36] : memref<1x1xf32, #tpu.memory_space<vmem>>, vector<1x1xf32>
        %58 = arith.mulf %56, %53 : vector<1x128xf32>
        %59 = vector.shape_cast %58 : vector<1x128xf32> to vector<1x1x128xf32>
        %cst_37 = arith.constant dense<0.000000e+00> : vector<1xf32>
        %60 = vector.multi_reduction <add>, %59, %cst_37 [1, 2] : vector<1x1x128xf32> to vector<1xf32>
        %61 = vector.shape_cast %60 : vector<1xf32> to vector<1x1x1xf32>
        %62 = vector.extract %61[0, 0, 0] : f32 from vector<1x1x1xf32>
        %63 = vector.broadcast %62 : f32 to vector<1x1xf32>
        %cst_38 = arith.constant 2.500000e-01 : f32
        %64 = vector.broadcast %cst_38 : f32 to vector<1x1xf32>
        %65 = arith.mulf %63, %64 : vector<1x1xf32>
        %66 = arith.subf %57, %65 : vector<1x1xf32>
        %c0_39 = arith.constant 0 : index
        %c0_40 = arith.constant 0 : index
        %67 = vector.load %arg11[%c0_39, %c0_40] : memref<1x1xf32, #tpu.memory_space<vmem>>, vector<1x1xf32>
        tpu.vector_store %arg11[%c0_39, %c0_40], %66 {strides = array<i32>} : memref<1x1xf32, #tpu.memory_space<vmem>>, vector<1x1xf32>,
      } else {
      }
    } else {
    }
    %c1_i32 = arith.constant 1 : i32
    %3 = arith.cmpi eq, %arg0, %c1_i32 : i32
    %4 = arith.extui %3 : i1 to i32
    %c0_i32_1 = arith.constant 0 : i32
    %5 = arith.cmpi ne, %4, %c0_i32_1 : i32
    scf.if %5 {
      %c0 = arith.constant 0 : index
      %c0_2 = arith.constant 0 : index
      %6 = vector.load %arg2[%c0, %c0_2] : memref<2x128xf32, #tpu.memory_space<vmem>>, vector<2x128xf32>
      %c0_3 = arith.constant 0 : index
      %c0_4 = arith.constant 0 : index
      %7 = vector.load %arg10[%c0_3, %c0_4] : memref<1x128xf32, #tpu.memory_space<vmem>>, vector<1x128xf32>
      %8 = vector.broadcast %7 : vector<1x128xf32> to vector<2x128xf32>
      %9 = arith.mulf %6, %8 : vector<2x128xf32>
      %c0_5 = arith.constant 0 : index
      %c0_6 = arith.constant 0 : index
      %10 = vector.load %arg4[%c0_5, %c0_6] : memref<128x4xf32, #tpu.memory_space<vmem>>, vector<128x4xf32>
      %cst = arith.constant dense<0.000000e+00> : vector<2x4xf32>
      %11 = tpu.matmul %9, %10, %cst {dimension_numbers = #tpu.dot_dimension_numbers<[1], [0], [0], [1], [0, 0, 1, 1], [], []>} : vector<2x128xf32>, vector<128x4xf32>, vector<2x4xf32> -> vector<2x4xf32>
      %c0_7 = arith.constant 0 : index
      %c0_8 = arith.constant 0 : index
      %12 = vector.load %arg11[%c0_7, %c0_8] : memref<1x1xf32, #tpu.memory_space<vmem>>, vector<1x1xf32>
      %13 = vector.broadcast %12 : vector<1x1xf32> to vector<2x4xf32>
      %14 = arith.addf %11, %13 : vector<2x4xf32>
      %c0_9 = arith.constant 0 : index
      %c0_10 = arith.constant 0 : index
      %15 = vector.load %arg6[%c0_9, %c0_10] : memref<2x4xf32, #tpu.memory_space<vmem>>, vector<2x4xf32>
      tpu.vector_store %arg6[%c0_9, %c0_10], %14 {strides = array<i32>} : memref<2x4xf32, #tpu.memory_space<vmem>>, vector<2x4xf32>,
    } else {
    }
    return
  }
  func.func @transform_0(%arg0: i32, %arg1: i32) -> (i32, i32) {
    %c0_i32 = arith.constant 0 : i32
    %c0_i32_0 = arith.constant 0 : i32
    return %arg1, %c0_i32 : i32, i32
  }
  func.func @transform_1(%arg0: i32, %arg1: i32) -> (i32, i32) {
    %c0_i32 = arith.constant 0 : i32
    %c0_i32_0 = arith.constant 0 : i32
    %c0_i32_1 = arith.constant 0 : i32
    return %c0_i32, %c0_i32_0 : i32, i32
  }
  func.func @transform_2(%arg0: i32, %arg1: i32) -> (i32, i32) {
    %c0_i32 = arith.constant 0 : i32
    %c0_i32_0 = arith.constant 0 : i32
    %c0_i32_1 = arith.constant 0 : i32
    return %c0_i32, %c0_i32_0 : i32, i32
  }
  func.func @transform_3(%arg0: i32, %arg1: i32) -> (i32, i32) {
    %c0_i32 = arith.constant 0 : i32
    %c0_i32_0 = arith.constant 0 : i32
    %c0_i32_1 = arith.constant 0 : i32
    return %c0_i32, %c0_i32_0 : i32, i32
  }
  func.func @transform_4(%arg0: i32, %arg1: i32) -> (i32, i32) {
    %0 = arith.muli %arg0, %arg1 : i32
    %c0_i32 = arith.constant 0 : i32
    %c0_i32_0 = arith.constant 0 : i32
    return %0, %c0_i32 : i32, i32
  }
}

</mosaic_0001>

<llo_original>
// kernel: cox_forward.1
$region0: #{cox_forward.1}
  #allocation0 [shape = 'u32[]', space=smem, size = 0x4, offset = 0x4, fixed_abs, tag = 'smem constant byte address 0x4 - core index']
  #allocation1 [shape = 'u32[144,128]{1,0:T(1,128)}', space=vmem, size = 0x12000, scoped, tag = 'internal scratch']
  #allocation2 [shape = 'f32[1,128]{1,0:T(1,128)}', space=vmem, size = 0x200, scoped, tag = 'scratch operand']
  #allocation3 [shape = 'f32[1,128]{1,0:T(1,128)}', space=vmem, size = 0x200, scoped, tag = 'scratch operand']
  #allocation4 [shape = 'f32[1,128]{1,0:T(1,128)}', space=vmem, size = 0x200, scoped, tag = 'scratch operand']
  #allocation5 [shape = 'f32[1,128]{1,0:T(1,128)}', space=vmem, size = 0x200, scoped, tag = 'scratch operand']
  #allocation6 [shape = 'f32[1,1]{1,0:T(1,128)}', space=vmem, size = 0x200, scoped, tag = 'scratch operand']
  #allocation7 [shape = 'f32[1,1]{1,0:T(1,128)S(1)}', space=vmem, size = 0x200, scoped, tag = 'scoped memory for cox_forward.1']
  %s0 = inlined_call_operand.vmem [shape: f32[2,128], index: 0, kind: input, shape index: {}]
  %s1 = inlined_call_operand.vmem [shape: f32[1,128], index: 1, kind: input, shape index: {}]
  %s2 = inlined_call_operand.vmem [shape: f32[128,4], index: 2, kind: input, shape index: {}]
  %s3 = inlined_call_operand.<no memory space> [shape: f32[1,1], index: 3, kind: input, shape index: {}]
  %s4 = inlined_call_operand.vmem [shape: f32[2,4], index: 4, kind: output, shape index: {}]
  %s5 = sld [smem:[#allocation0]]
  $region65: #{cox_forward.1} parent=0
    _
  %s7 = ssub.s32 1, %s5
  %s8 = scalar_select 0, %s7, %s5
  %v9 = vstv %s3
  %10 = vst [vmem:[#allocation7] sm:$0x1] %v9
  loop: start=0, step=1, limit=4
  $region2: #{cox_forward.1} parent=0 // loop_pre_header
    _
  $region3: #{cox_forward.1} parent=0 // loop_header
    %s12 = sphi 0, %s16
    %p13 = scmp.ge.s32.totalorder %s12, 4
    %s19 = sphi 0, %s31
    %s20 = sphi 0, %s27
    %s21 = sphi 0, %s19
    %s22 = sphi 0, %s20
    %s23 = sphi 0, %s21
    %s24 = sphi 0, %s22
    %s34 = sphi 0, %s36
    %s37 = sphi 0, %s34
    %s38 = sphi 0, %s37
    %s54 = sphi 0, %s38
    %s58 = sphi 0, %s58
    %s60 = sphi 0, %s58
    %s61 = sphi 0, %s60
    %s75 = sphi 0, %s61
    %s79 = sphi 0, %s79
    %s81 = sphi 0, %s79
    %s82 = sphi 0, %s81
    %s96 = sphi 0, %s82
    %s100 = sphi 0, %s100
    %s102 = sphi 0, %s100
    %s103 = sphi 0, %s102
    %s117 = sphi 0, %s103
    %s125 = sphi 0, %s127
    %s128 = sphi 0, %s125
    %s129 = sphi 0, %s128
    %s145 = sphi 0, %s129
  $region4: #{cox_forward.1} parent=0 // loop_header_branch
    %15 = sbr.rel (%p13) target = $region8
  $region5: #{cox_forward.1} parent=0 // loop_body
    %s17 = ssub.s32 %s12, 1
    %s18 = ssub.s32 %s12, 2
    %s25 = sadd.s32 1, %s20
    %p26 = scmp.ge.s32.totalorder %s25, 1
    %s27 = scalar_select %p26, 0, %s25
    %s28 = sadd.s32 1, %s19
    %s29 = scalar_select %p26, %s28, %s19
    %p30 = scmp.ge.s32.totalorder %s29, 2
    %s31 = scalar_select %p30, 0, %s29
    %s32 = ssub.s32 %s20, %s27
    %p33 = scmp.eq.s32.totalorder %s32, 0
    %s35 = sadd.s32 %s34, 1
    %s36 = scalar_select %p33, %s34, %s35
    %p39 = pneg %p33
    %p40 = scmp.eq.s32.totalorder %s12, 1
    %p41 = por %p39, %p40
    %p42 = scmp.ne.s32.totalorder %s34, %s37
    %p43 = scmp.eq.s32.totalorder %s12, 0
    %p44 = por %p42, %p43
    %p45 = scmp.ne.s32.totalorder %s34, %s37
    %p46 = scmp.eq.s32.totalorder %s17, 1
    %p47 = por %p45, %p46
    %p48 = scmp.ne.s32.totalorder %s37, %s38
    %p49 = scmp.eq.s32.totalorder %s17, 0
    %p50 = por %p48, %p49
    %p51 = scmp.ne.s32.totalorder %s37, %s38
    %p52 = scmp.eq.s32.totalorder %s18, 1
    %p53 = por %p51, %p52
    %p55 = scmp.ne.s32.totalorder %s38, %s54
    %p56 = scmp.eq.s32.totalorder %s18, 0
    %p57 = por %p55, %p56
    %s59 = sadd.s32 %s58, 1
    %p62 = scmp.eq.s32.totalorder %s12, 1
    %p63 = scmp.ne.s32.totalorder %s58, %s60
    %p64 = scmp.eq.s32.totalorder %s12, 0
    %p65 = por %p63, %p64
    %p66 = scmp.ne.s32.totalorder %s58, %s60
    %p67 = scmp.eq.s32.totalorder %s17, 1
    %p68 = por %p66, %p67
    %p69 = scmp.ne.s32.totalorder %s60, %s61
    %p70 = scmp.eq.s32.totalorder %s17, 0
    %p71 = por %p69, %p70
    %p72 = scmp.ne.s32.totalorder %s60, %s61
    %p73 = scmp.eq.s32.totalorder %s18, 1
    %p74 = por %p72, %p73
    %p76 = scmp.ne.s32.totalorder %s61, %s75
    %p77 = scmp.eq.s32.totalorder %s18, 0
    %p78 = por %p76, %p77
    %s80 = sadd.s32 %s79, 1
    %p83 = scmp.eq.s32.totalorder %s12, 1
    %p84 = scmp.ne.s32.totalorder %s79, %s81
    %p85 = scmp.eq.s32.totalorder %s12, 0
    %p86 = por %p84, %p85
    %p87 = scmp.ne.s32.totalorder %s79, %s81
    %p88 = scmp.eq.s32.totalorder %s17, 1
    %p89 = por %p87, %p88
    %p90 = scmp.ne.s32.totalorder %s81, %s82
    %p91 = scmp.eq.s32.totalorder %s17, 0
    %p92 = por %p90, %p91
    %p93 = scmp.ne.s32.totalorder %s81, %s82
    %p94 = scmp.eq.s32.totalorder %s18, 1
    %p95 = por %p93, %p94
    %p97 = scmp.ne.s32.totalorder %s82, %s96
    %p98 = scmp.eq.s32.totalorder %s18, 0
    %p99 = por %p97, %p98
    %s101 = sadd.s32 %s100, 1
    %p104 = scmp.eq.s32.totalorder %s12, 1
    %p105 = scmp.ne.s32.totalorder %s100, %s102
    %p106 = scmp.eq.s32.totalorder %s12, 0
    %p107 = por %p105, %p106
    %p108 = scmp.ne.s32.totalorder %s100, %s102
    %p109 = scmp.eq.s32.totalorder %s17, 1
    %p110 = por %p108, %p109
    %p111 = scmp.ne.s32.totalorder %s102, %s103
    %p112 = scmp.eq.s32.totalorder %s17, 0
    %p113 = por %p111, %p112
    %p114 = scmp.ne.s32.totalorder %s102, %s103
    %p115 = scmp.eq.s32.totalorder %s18, 1
    %p116 = por %p114, %p115
    %p118 = scmp.ne.s32.totalorder %s103, %s117
    %p119 = scmp.eq.s32.totalorder %s18, 0
    %p120 = por %p118, %p119
    %s121 = smul.u32 %s19, %s20
    %s122 = smul.u32 %s31, %s27
    %s123 = ssub.s32 %s121, %s122
    %p124 = scmp.eq.s32.totalorder %s123, 0
    %s126 = sadd.s32 %s125, 1
    %s127 = scalar_select %p124, %s125, %s126
    %p130 = pneg %p124
    %p131 = scmp.eq.s32.totalorder %s12, 1
    %p132 = por %p130, %p131
    %p133 = scmp.ne.s32.totalorder %s125, %s128
    %p134 = scmp.eq.s32.totalorder %s12, 0
    %p135 = por %p133, %p134
    %p136 = scmp.ne.s32.totalorder %s125, %s128
    %p137 = scmp.eq.s32.totalorder %s17, 1
    %p138 = por %p136, %p137
    %p139 = scmp.ne.s32.totalorder %s128, %s129
    %p140 = scmp.eq.s32.totalorder %s17, 0
    %p141 = por %p139, %p140
    %p142 = scmp.ne.s32.totalorder %s128, %s129
    %p143 = scmp.eq.s32.totalorder %s18, 1
    %p144 = por %p142, %p143
    %p146 = scmp.ne.s32.totalorder %s129, %s145
    %p147 = scmp.eq.s32.totalorder %s18, 0
    %p148 = por %p146, %p147
    %p149 = scmp.le.s32.totalorder 1, %s12
    %p150 = scmp.lt.s32.totalorder %s12, 3
    %p151 = pnand %p149, %p150
    %p152 = pneg %p151
    // Predicated region
    $region9: #{cox_forward.1} parent=5 // pred_check
      _
    $region10: #{cox_forward.1} parent=5 // pred_check_branch
      %154 = sbr.rel (%p151) target = $region12
    $region11: #{cox_forward.1} parent=5 // pred_region
      %s155 = ssub.s32 %s12, 1
      // Predicated region
      $region13: #{cox_forward.1} parent=11 // pred_check
        %p156 = pneg %p50
      $region14: #{cox_forward.1} parent=11 // pred_check_branch
        %158 = sbr.rel (%p156) target = $region16
      $region15: #{cox_forward.1} parent=11 // pred_region
        %p159 = scmp.lt.s32.totalorder %s22, 0
        %s160 = scalar_select %p159, %s22, 0
        %s161 = smul.addr %s160, 2
        %s162 = scalar_lea.vmem %s0, %s161
      $region16: #{cox_forward.1} parent=11 // pred_fallthru
        _
      // Predicated region
      $region17: #{cox_forward.1} parent=11 // pred_check
        %p163 = pneg %p71
      $region18: #{cox_forward.1} parent=11 // pred_check_branch
        %165 = sbr.rel (%p163) target = $region20
      $region19: #{cox_forward.1} parent=11 // pred_region
        _
      $region20: #{cox_forward.1} parent=11 // pred_fallthru
        _
      // Predicated region
      $region21: #{cox_forward.1} parent=11 // pred_check
        %p166 = pneg %p92
      $region22: #{cox_forward.1} parent=11 // pred_check_branch
        %168 = sbr.rel (%p166) target = $region24
      $region23: #{cox_forward.1} parent=11 // pred_region
        _
      $region24: #{cox_forward.1} parent=11 // pred_fallthru
        _
      // Predicated region
      $region25: #{cox_forward.1} parent=11 // pred_check
        %p169 = pneg %p113
      $region26: #{cox_forward.1} parent=11 // pred_check_branch
        %171 = sbr.rel (%p169) target = $region28
      $region27: #{cox_forward.1} parent=11 // pred_region
        _
      $region28: #{cox_forward.1} parent=11 // pred_fallthru
        _
    $region12: #{cox_forward.1} parent=5 // pred_fallthru
      _
    %p172 = scmp.lt.s32.totalorder %s12, 2
    // Predicated region
    $region29: #{cox_forward.1} parent=5 // pred_check
      %p173 = pneg %p172
    $region30: #{cox_forward.1} parent=5 // pred_check_branch
      %175 = sbr.rel (%p173) target = $region32
    $region31: #{cox_forward.1} parent=5 // pred_region
      _
    $region32: #{cox_forward.1} parent=5 // pred_fallthru
      _
    %p176 = scmp.le.s32.totalorder 1, %s12
    %p177 = scmp.lt.s32.totalorder %s12, 3
    %p178 = pnand %p176, %p177
    %p179 = pneg %p178
    // Predicated region
    $region33: #{cox_forward.1} parent=5 // pred_check
      _
    $region34: #{cox_forward.1} parent=5 // pred_check_branch
      %181 = sbr.rel (%p178) target = $region36
    $region35: #{cox_forward.1} parent=5 // pred_region
      %s182 = ssub.s32 %s12, 1
      %p183 = scmp.lt.s32.totalorder %s22, 0
      %s184 = scalar_select %p183, %s22, 0
      %s185 = smul.addr %s184, 2
      %s186 = scalar_lea.vmem %s0, %s185
      %p187 = pneg %p50
      %p188 = pneg %p47
      %p189 = pneg %p71
      %p190 = pneg %p68
      %p191 = pneg %p92
      %p192 = pneg %p89
      %p193 = pneg %p113
      %p194 = pneg %p110
      %p195 = pneg %p141
      %p196 = pneg %p138
      %s197 = smul.u32 %s21, %s22
      %p198 = scmp.lt.s32.totalorder %s197, 0
      %s199 = scalar_select %p198, %s197, 0
      %s200 = smul.addr %s199, 2
      %s201 = scalar_lea.vmem %s4, %s200
      %p202 = scmp.lt.s32.totalorder %s22, 0
      %s203 = scalar_select %p202, %s22, 0
      %s204 = smul.addr %s203, 2
      %s205 = scalar_lea.vmem %s0, %s204
      %s206 = smul.u32 %s21, %s22
      %p207 = scmp.lt.s32.totalorder %s206, 0
      %s208 = scalar_select %p207, %s206, 0
      %s209 = smul.addr %s208, 2
      %s210 = scalar_lea.vmem %s4, %s209
      %s211 = smul.u32 %s21, %s22
      %p212 = scmp.eq.s32.totalorder %s21, 0
      // Predicated region
      $region37: #{cox_forward.1} parent=35 // pred_check
        %p213 = pneg %p212
      $region38: #{cox_forward.1} parent=35 // pred_check_branch
        %215 = sbr.rel (%p213) target = $region40
      $region39: #{cox_forward.1} parent=35 // pred_region
        %v216 = vld [vmem:[%s205] sm:$0x3]
        %p217 = scmp.eq.s32.totalorder %s22, 0
        // Predicated region
        $region41: #{cox_forward.1} parent=39 // pred_check
          %p218 = pneg %p217
        $region42: #{cox_forward.1} parent=39 // pred_check_branch
          %220 = sbr.rel (%p218) target = $region44
        $region43: #{cox_forward.1} parent=39 // pred_region
          %221 = vrot.lane.b32.xlu0 %v216, 32
          %v222 = vpop.permute.xlu0 %221
          %v223 = vadd.f32 %v216, %v222
          %224 = vrot.lane.b32.xlu0 %v216, 64
          %v225 = vpop.permute.xlu0 %224
          %v226 = vadd.f32 %v223, %v225
          %227 = vrot.lane.b32.xlu0 %v216, 96
          %v228 = vpop.permute.xlu0 %227
          %v229 = vadd.f32 %v226, %v228
          %v230 = vmul.f32 %v229, 0.25
          %231 = vst [vmem:[#allocation4] sm:$0x1] %v230
          %232 = vst [vmem:[#allocation2] sm:$0x1] 0.0
          %233 = vst [vmem:[#allocation3] sm:$0x1] 0.0
        $region44: #{cox_forward.1} parent=39 // pred_fallthru
          _
        %v234 = vld [vmem:[#allocation4] sm:$0x1]
        %v236 = vlaneseq
        %v237 = vshrl.u32 %v236, 7
        %v238 = vsub.s32 0, %v237
        %v239 = vrot.slane %v234, %v238
        %v241 = vsub.f32 %v216, %v239
        %v242 = vld [vmem:[#allocation2] sm:$0x1]
        %vm243 = vcmask 1041408
        %v244 = vsel %vm243, %v241, 0.0
        %v245 = vrot.slane %v244, 4
        %v246 = vadd.f32 %v244, %v245
        %v247 = vrot.slane %v246, 2
        %v248 = vadd.f32 %v246, %v247
        %v249 = vrot.slane %v248, 1
        %v250 = vadd.f32 %v248, %v249
        %v251 = vadd.f32 %v242, %v250
        %252 = vst [vmem:[#allocation2] sm:$0x1] %v251
        %v253 = vld [vmem:[#allocation3] sm:$0x1]
        %v254 = vmul.f32 %v241, %v241
        %v255 = vsel %vm243, %v254, 0.0
        %v256 = vrot.slane %v255, 4
        %v257 = vadd.f32 %v255, %v256
        %v258 = vrot.slane %v257, 2
        %v259 = vadd.f32 %v257, %v258
        %v260 = vrot.slane %v259, 1
        %v261 = vadd.f32 %v259, %v260
        %v262 = vadd.f32 %v253, %v261
        %263 = vst [vmem:[#allocation3] sm:$0x1] %v262
        // Predicated region
        $region45: #{cox_forward.1} parent=39 // pred_check
          %p264 = pneg %p217
        $region46: #{cox_forward.1} parent=39 // pred_check_branch
          %266 = sbr.rel (%p264) target = $region48
        $region47: #{cox_forward.1} parent=39 // pred_region
          %v267 = vld [vmem:[#allocation2] sm:$0x1]
          %268 = vrot.lane.b32.xlu0 %v267, 32
          %v269 = vpop.permute.xlu0 %268
          %v270 = vadd.f32 %v267, %v269
          %271 = vrot.lane.b32.xlu0 %v267, 64
          %v272 = vpop.permute.xlu0 %271
          %v273 = vadd.f32 %v270, %v272
          %274 = vrot.lane.b32.xlu0 %v267, 96
          %v275 = vpop.permute.xlu0 %274
          %v276 = vadd.f32 %v273, %v275
          %v277 = vmul.f32 %v276, 0.125
          %v278 = vld [vmem:[#allocation3] sm:$0x1]
          %279 = vrot.lane.b32.xlu0 %v278, 32
          %v280 = vpop.permute.xlu0 %279
          %v281 = vadd.f32 %v278, %v280
          %282 = vrot.lane.b32.xlu0 %v278, 64
          %v283 = vpop.permute.xlu0 %282
          %v284 = vadd.f32 %v281, %v283
          %285 = vrot.lane.b32.xlu0 %v278, 96
          %v286 = vpop.permute.xlu0 %285
          %v287 = vadd.f32 %v284, %v286
          %v288 = vmul.f32 %v287, 0.125
          %v289 = vmul.f32 %v277, %v277
          %v290 = vsub.f32 %v288, %v289
          %v291 = vmax.f32 %v290, 0.0
          %v292 = vadd.f32 %v291, 1e-05
          %v293 = vrsqrt.pop %v292
          %v294 = vld [vmem:[%s1] sm:$0x1]
          %v295 = vmul.f32 %v294, %v293
          %296 = vst [vmem:[#allocation5] sm:$0x1] %v295
          %v297 = vld [vmem:[#allocation4] sm:$0x1]
          %v298 = vadd.f32 %v277, %v297
          %v299 = vld [vmem:[#allocation7] sm:$0x1]
          %v300 = vmul.f32 %v298, %v295
          %vm301 = vcmask 1040384
          %v302 = vsel %vm301, %v300, 0.0
          %303 = vadd.xlane.f32.xlu0 %v302
          %v304 = vpop.xlane.xlu0 %303
          %v305 = vrot.slane %v304, 4
          %v306 = vadd.f32 %v304, %v305
          %v307 = vrot.slane %v306, 2
          %v308 = vadd.f32 %v306, %v307
          %v309 = vrot.slane %v308, 1
          %v310 = vadd.f32 %v308, %v309
          %s311 = vtos %v310
          %v312 = vstv %s311
          %v313 = vmul.f32 %v312, 0.25
          %v314 = vsub.f32 %v299, %v313
          %vm315 = vcmask 0
          %316 = vst.msk [vmem:[#allocation6] sm:$0x1] %vm315, %v314
        $region48: #{cox_forward.1} parent=39 // pred_fallthru
          _
      $region40: #{cox_forward.1} parent=35 // pred_fallthru
        _
      %p317 = scmp.eq.s32.totalorder %s21, 1
      // Predicated region
      $region49: #{cox_forward.1} parent=35 // pred_check
        %p318 = pneg %p317
      $region50: #{cox_forward.1} parent=35 // pred_check_branch
        %320 = sbr.rel (%p318) target = $region52
      $region51: #{cox_forward.1} parent=35 // pred_region
        %v321 = vld [vmem:[%s205] sm:$0x3]
        %v322 = vld [vmem:[#allocation5] sm:$0x1]
        %v324 = vlaneseq
        %v325 = vshrl.u32 %v324, 7
        %v326 = vsub.s32 0, %v325
        %v327 = vrot.slane %v322, %v326
        %v329 = vmul.f32 %v321, %v327
        %v330 = vld [vmem:[%s2] sm:$0xff]
        %v331 = vld [vmem:[%s2 + $0x8] sm:$0xff]
        %v332 = vld [vmem:[%s2 + $0x10] sm:$0xff]
        %v333 = vld [vmem:[%s2 + $0x18] sm:$0xff]
        %v334 = vld [vmem:[%s2 + $0x20] sm:$0xff]
        %v335 = vld [vmem:[%s2 + $0x28] sm:$0xff]
        %v336 = vld [vmem:[%s2 + $0x30] sm:$0xff]
        %v337 = vld [vmem:[%s2 + $0x38] sm:$0xff]
        %v338 = vld [vmem:[%s2 + $0x40] sm:$0xff]
        %v339 = vld [vmem:[%s2 + $0x48] sm:$0xff]
        %v340 = vld [vmem:[%s2 + $0x50] sm:$0xff]
        %v341 = vld [vmem:[%s2 + $0x58] sm:$0xff]
        %v342 = vld [vmem:[%s2 + $0x60] sm:$0xff]
        %v343 = vld [vmem:[%s2 + $0x68] sm:$0xff]
        %v344 = vld [vmem:[%s2 + $0x70] sm:$0xff]
        %v345 = vld [vmem:[%s2 + $0x78] sm:$0xff]
        %v346 = vld [vmem:[#allocation6] sm:$0x1]
        %v348 = vlaneseq
        %v349 = vshrl.u32 %v348, 7
        %v350 = vsub.s32 0, %v349
        %v351 = vrot.slane %v346, %v350
        %352 = vset.pattern.permute.xlu0 0
        %353 = vperm.xlu0 %352, %v351
        %v354 = vpop.permute.xlu0 %353
        %356 = vmatprep.subr.mxu0 0.0
        %357 = vmatpush1.msra.mxu0 %v330
        %358 = vmatprep.subr.mxu0 0.0
        %359 = vmatpush1.msra.mxu0 %v331
        %360 = vmatprep.subr.mxu0 0.0
        %361 = vmatpush1.msra.mxu0 %v332
        %362 = vmatprep.subr.mxu0 0.0
        %363 = vmatpush1.msra.mxu0 %v333
        %364 = vmatprep.subr.mxu0 0.0
        %365 = vmatpush1.msra.mxu0 %v334
        %366 = vmatprep.subr.mxu0 0.0
        %367 = vmatpush1.msra.mxu0 %v335
        %368 = vmatprep.subr.mxu0 0.0
        %369 = vmatpush1.msra.mxu0 %v336
        %370 = vmatprep.subr.mxu0 0.0
        %371 = vmatpush1.msra.mxu0 %v337
        %372 = vmatprep.subr.mxu0 0.0
        %373 = vmatpush1.msra.mxu0 %v338
        %374 = vmatprep.subr.mxu0 0.0
        %375 = vmatpush1.msra.mxu0 %v339
        %376 = vmatprep.subr.mxu0 0.0
        %377 = vmatpush1.msra.mxu0 %v340
        %378 = vmatprep.subr.mxu0 0.0
        %379 = vmatpush1.msra.mxu0 %v341
        %380 = vmatprep.subr.mxu0 0.0
        %381 = vmatpush1.msra.mxu0 %v342
        %382 = vmatprep.subr.mxu0 0.0
        %383 = vmatpush1.msra.mxu0 %v343
        %384 = vmatprep.subr.mxu0 0.0
        %385 = vmatpush1.msra.mxu0 %v344
        %386 = vmatprep.subr.mxu0 0.0
        %387 = vmatpush1.msra.mxu0 %v345
        %388 = vmatprep.subr.mxu0 0.0
        %389 = vmatpush1.msra.mxu0 0.0
        %390 = vmatprep.subr.mxu0 0.0
        %391 = vmatpush1.msra.mxu0 0.0
        %392 = vmatprep.subr.mxu0 0.0
        %393 = vmatpush1.msra.mxu0 0.0
        %394 = vmatprep.subr.mxu0 0.0
        %395 = vmatpush1.msra.mxu0 0.0
        %396 = vmatprep.subr.mxu0 0.0
        %397 = vmatpush1.msra.mxu0 0.0
        %398 = vmatprep.subr.mxu0 0.0
        %399 = vmatpush1.msra.mxu0 0.0
        %400 = vmatprep.subr.mxu0 0.0
        %401 = vmatpush1.msra.mxu0 0.0
        %402 = vmatprep.subr.mxu0 0.0
        %403 = vmatpush1.msra.mxu0 0.0
        %404 = vmatprep.subr.mxu0 0.0
        %405 = vmatpush1.msra.mxu0 0.0
        %406 = vmatprep.subr.mxu0 0.0
        %407 = vmatpush1.msra.mxu0 0.0
        %408 = vmatprep.subr.mxu0 0.0
        %409 = vmatpush1.msra.mxu0 0.0
        %410 = vmatprep.subr.mxu0 0.0
        %411 = vmatpush1.msra.mxu0 0.0
        %412 = vmatprep.subr.mxu0 0.0
        %413 = vmatpush1.msra.mxu0 0.0
        %414 = vmatprep.subr.mxu0 0.0
        %415 = vmatpush1.msra.mxu0 0.0
        %416 = vmatprep.subr.mxu0 0.0
        %417 = vmatpush1.msra.mxu0 0.0
        %418 = vmatprep.subr.mxu0 0.0
        %419 = vmatpush1.msra.mxu0 0.0
        %420 = vmatprep.mubr.f32.mxu0 0.0
        %421 = vmatmul.mubr.f32.gmra.mrb[0].mxu0 %v329
        %v422 = vpop.f32.mrb[0].mxu0
        %v423 = vadd.f32 %v354, %v422
        %v424 = vpop.f32.mrb[0].mxu0
        %425 = vdwg.mxu0
        %vm426 = vcmask 25600
        %427 = vst.msk [vmem:[%s210] sm:$0x3] %vm426, %v423
      $region52: #{cox_forward.1} parent=35 // pred_fallthru
        _
      %s428 = smul.u32 %s21, %s22
      %p429 = scmp.lt.s32.totalorder %s428, 0
      %s430 = scalar_select %p429, %s428, 0
      %s431 = smul.addr %s430, 2
      %s432 = scalar_lea.vmem %s4, %s431
      // Predicated region
      $region53: #{cox_forward.1} parent=35 // pred_check
        %p433 = pneg %p138
      $region54: #{cox_forward.1} parent=35 // pred_check_branch
        %435 = sbr.rel (%p433) target = $region56
      $region55: #{cox_forward.1} parent=35 // pred_region
        %s436 = smul.u32 %s21, %s22
      $region56: #{cox_forward.1} parent=35 // pred_fallthru
        _
    $region36: #{cox_forward.1} parent=5 // pred_fallthru
      _
    %p437 = scmp.le.s32.totalorder 2, %s12
    // Predicated region
    $region57: #{cox_forward.1} parent=5 // pred_check
      %p438 = pneg %p437
    $region58: #{cox_forward.1} parent=5 // pred_check_branch
      %440 = sbr.rel (%p438) target = $region60
    $region59: #{cox_forward.1} parent=5 // pred_region
      %s441 = ssub.s32 %s12, 2
      // Predicated region
      $region61: #{cox_forward.1} parent=59 // pred_check
        %p442 = pneg %p144
      $region62: #{cox_forward.1} parent=59 // pred_check_branch
        %444 = sbr.rel (%p442) target = $region64
      $region63: #{cox_forward.1} parent=59 // pred_region
        %s445 = smul.u32 %s23, %s24
        %p446 = scmp.lt.s32.totalorder %s445, 0
        %s447 = scalar_select %p446, %s445, 0
        %s448 = smul.addr %s447, 2
        %s449 = scalar_lea.vmem %s4, %s448
      $region64: #{cox_forward.1} parent=59 // pred_fallthru
        _
    $region60: #{cox_forward.1} parent=5 // pred_fallthru
      _
  $region6: #{cox_forward.1} parent=0 // loop_footer
    %s16 = sadd.s32 1, %s12
  $region7: #{cox_forward.1} parent=0 // loop_footer_branch
    %11 = sbr.rel target = $region3
  $region8: #{cox_forward.1} parent=0 // loop_exit
    _

</llo_original>
